<compile_context>
chip_gen: v7x
topology: tpu7x:2x2x1
jax: 0.10.0
libtpu: 0.0.40
codegen_flags: <defaults>
</compile_context>

<pallas_src>
import math
from functools import partial
from typing import NamedTuple

import jax
import jax.numpy as jnp
import numpy as np
from jax.experimental import pallas as pl
from jax.experimental.pallas import tpu as pltpu


# ----------------------------------------------------------------------------
# same_padding_1d (identical semantics to the PyTorch helper)
# ----------------------------------------------------------------------------
def same_padding_1d(in_size: int, filter_size: int, stride_size: int):
    out_width = int(np.ceil(float(in_size) / float(stride_size)))
    pad_along_width = int((out_width - 1) * stride_size + filter_size - in_size)
    pad_left = pad_along_width // 2
    pad_right = pad_along_width - pad_left
    return (pad_left, pad_right), out_width


# ----------------------------------------------------------------------------
# Static per-layer plan
# ----------------------------------------------------------------------------
class _ConvMeta(NamedTuple):
    K: int
    Cin: int
    Cout: int
    stride: int
    pad_l: int
    pad_r: int
    w_in: int
    w_out: int
    relu: bool


def _network_metas(params, obs_width, obs_channels):
    """Shape plan mirroring VisionNetwork1D.__init__ (policy/logits path)."""
    metas = []
    in_w, in_c = int(obs_width), int(obs_channels)
    for layer in params["convs"]:
        K, Cin, Cout = (int(d) for d in layer["w"].shape)
        if Cin != in_c:
            raise ValueError("channel mismatch in conv stack")
        pad = layer["padding"] if layer["padding"] is not None else (0, 0)
        s = int(layer["stride"])
        wp = in_w + pad[0] + pad[1]
        if wp < K:
            raise ValueError("filter larger than (padded) input")
        wo = (wp - K) // s + 1
        metas.append(_ConvMeta(K=K, Cin=Cin, Cout=Cout, stride=s,
                               pad_l=int(pad[0]), pad_r=int(pad[1]),
                               w_in=in_w, w_out=wo, relu=bool(layer["relu"])))
        in_w, in_c = wo, Cout
    if in_w != 1:
        raise ValueError(
            "Given `conv_filters` do not reduce the spatial dim to 1 "
            "(last conv width = %d)" % in_w)
    kl, c_last, n_out = (int(d) for d in params["logits"]["w"].shape)
    assert kl == 1 and c_last == in_c, "logits layer must be a 1x1 conv"
    return tuple(metas), n_out


# ----------------------------------------------------------------------------
# Host-side pre-bake: each conv layer -> dense banded matmul weight + bias row
# ----------------------------------------------------------------------------
def pack_dense_params(params, metas, compute_dtype=jnp.float32):
    """conv [K,Cin,Cout] -> banded [W_in*Cin, W_out*Cout]; bias -> [1, W_out*Cout].

    Flattening convention is w-major / c-minor, i.e. x2[b, w*C + c] = x[b, w, c],
    which exactly matches obs.reshape(B, W*C) of an NWC tensor.  SAME zero
    padding is folded by simply dropping out-of-range taps (they multiply
    zeros), stride by the band's column pattern.
    """
    packed = []
    for layer, m in zip(params["convs"], metas):
        w_kio = np.asarray(layer["w"], np.float32)            # [K, Cin, Cout]
        mat = np.zeros((m.w_in * m.Cin, m.w_out * m.Cout), np.float32)
        for wo in range(m.w_out):
            for k in range(m.K):
                wi = wo * m.stride - m.pad_l + k
                if 0 <= wi < m.w_in:
                    mat[wi * m.Cin:(wi + 1) * m.Cin,
                        wo * m.Cout:(wo + 1) * m.Cout] = w_kio[k]
        b_full = np.tile(np.asarray(layer["b"], np.float32),
                         m.w_out).reshape(1, m.w_out * m.Cout)
        packed.append(jnp.asarray(mat, compute_dtype))
        packed.append(jnp.asarray(b_full, jnp.float32))        # f32 (post-accum add)
    # logits 1x1 conv on width-1 features == plain matmul [C_last, n_out]
    lw = np.asarray(params["logits"]["w"], np.float32)          # [1, C_last, n_out]
    _, c_last, n_out = lw.shape
    packed.append(jnp.asarray(lw.reshape(c_last, n_out), compute_dtype))
    packed.append(jnp.asarray(
        np.asarray(params["logits"]["b"], np.float32).reshape(1, n_out), jnp.float32))
    return tuple(packed)


# ----------------------------------------------------------------------------
# Fused Pallas kernel: whole network == a chain of (matmul + bias [+ relu])
# ----------------------------------------------------------------------------
def _make_fused_kernel(n_layers, relus, compute_dtype):
    n_in = 1 + 2 * (n_layers + 1)   # obs + (W, b) per conv layer + (W, b) logits

    def kernel(*refs):
        x_ref = refs[0]
        wb_refs = refs[1:n_in]
        w_refs = wb_refs[0::2]
        b_refs = wb_refs[1::2]
        o_ref = refs[n_in]

        h = x_ref[...].astype(compute_dtype)          # [tb, W0*C0] lane-dense slab
        for i in range(n_layers):
            y = jnp.dot(h, w_refs[i][...],
                        preferred_element_type=jnp.float32) + b_refs[i][...]
            if relus[i]:
                y = jnp.maximum(y, 0.0)
            h = y.astype(compute_dtype)
        # logits epilogue (no activation); output is the TRUE [tb, n_out] block
        o_ref[...] = (jnp.dot(h, w_refs[n_layers][...],
                              preferred_element_type=jnp.float32)
                      + b_refs[n_layers][...]).astype(o_ref.dtype)

    return kernel


# ----------------------------------------------------------------------------
# Batch-tile choice: big tiles, >= 2 grid steps for large B (v7x megacore),
# multiple of 8 rows, no wrapper-side batch padding (Pallas handles the
# partial last block).
# ----------------------------------------------------------------------------
def _choose_batch_tile(B, batch_tile):
    if B <= 16:
        return B                                   # single step, block == array
    half = -(-B // 2)                              # ceil(B/2) -> >= 2 steps
    return max(8, min(batch_tile, (half // 8) * 8))


# ----------------------------------------------------------------------------
# Forward wrapper: one pallas_call for the whole network
# ----------------------------------------------------------------------------
def vision_network_1d_forward(packed_wb, obs, *, metas, num_outputs,
                              batch_tile=1024, compute_dtype=jnp.float32):
    """obs [B, W, C] float -> logits [B, num_outputs]."""
    B, W, C = obs.shape
    assert W == metas[0].w_in and C == metas[0].Cin, "obs shape mismatch"
    in_feat = W * C
    n_layers = len(metas)

    # NWC -> lane-dense [B, W*C] slab; contiguous reshape (no extra HBM pass).
    # With bf16 compute the cast also halves the dominant obs HBM read.
    x = obs.astype(compute_dtype).reshape(B, in_feat)

    tb = _choose_batch_tile(B, batch_tile)
    grid = (pl.cdiv(B, tb),)

    in_specs = [pl.BlockSpec((tb, in_feat), lambda b: (b, 0))]
    # weights/biases: full-array blocks, constant index_map -> DMA'd once,
    # resident in VMEM across the whole grid.
    in_specs += [pl.BlockSpec(a.shape, lambda b: (0, 0)) for a in packed_wb]
    out_specs = pl.BlockSpec((tb, num_outputs), lambda b: (b, 0))

    # Explicit VMEM budget: 2x double-buffered in/out blocks + 2x weights +
    # f32 temporaries (a few activation-width slabs), capped v7x-safe.
    itemsize = np.dtype(compute_dtype).itemsize
    in_block = tb * in_feat * itemsize
    out_block = tb * num_outputs * 4
    wb_bytes = sum(int(np.prod(a.shape)) * a.dtype.itemsize for a in packed_wb)
    max_width = max([in_feat] + [m.w_out * m.Cout for m in metas] + [num_outputs])
    tmp_bytes = 4 * tb * max_width * 4
    vmem_limit = int(min(48 << 20,
                         max(8 << 20,
                             2 * in_block + 2 * out_block + 2 * wb_bytes
                             + tmp_bytes + (4 << 20))))

    kernel = _make_fused_kernel(n_layers, tuple(m.relu for m in metas),
                                compute_dtype)
    out = pl.pallas_call(
        kernel,
        out_shape=jax.ShapeDtypeStruct((B, num_outputs), jnp.float32),
        grid_spec=pltpu.PrefetchScalarGridSpec(
            num_scalar_prefetch=0,
            grid=grid,
            in_specs=in_specs,
            out_specs=out_specs,
        ),
        compiler_params=pltpu.CompilerParams(
            dimension_semantics=("parallel",),   # batch axis -> v7x megacore
            vmem_limit_bytes=vmem_limit,
        ),
    )(x, *packed_wb)
    return out
    # TODO(synk): value_function() (separate value conv branch) is a distinct
    # method not exercised by forward(); it would reuse this same fused kernel
    # with its own pre-baked banded weights.


# ----------------------------------------------------------------------------
# Deterministic parameter init (mimics xavier_uniform_ weight + zero bias)
# ----------------------------------------------------------------------------
def init_conv_params(key, cin, cout, k):
    fan_in, fan_out = cin * k, cout * k
    bound = math.sqrt(6.0 / (fan_in + fan_out))
    w_oik = jax.random.uniform(key, (cout, cin, k), jnp.float32, -bound, bound)
    w_kio = jnp.transpose(w_oik, (2, 1, 0))  # [K, Cin, Cout]
    b = jnp.zeros((cout,), jnp.float32)      # nn.init.constant_(bias, 0)
    return w_kio, b


def build_vision_network_1d(key, obs_w, obs_c, conv_filters, num_outputs):
    """Params dict mirroring VisionNetwork1D.__init__ (policy/logits path)."""
    params = {"convs": [], "logits": None}
    in_channels, in_size = obs_c, obs_w
    keys = jax.random.split(key, len(conv_filters) + 1)

    # filters[:-1]: SAME padding + activation
    for i, (out_channels, kernel, stride) in enumerate(conv_filters[:-1]):
        padding, out_size = same_padding_1d(in_size, kernel, stride)
        w, b = init_conv_params(keys[i], in_channels, out_channels, kernel)
        params["convs"].append(dict(w=w, b=b, stride=stride, padding=padding, relu=True))
        in_channels, in_size = out_channels, out_size

    # last filter: VALID padding + activation
    out_channels, kernel, stride = conv_filters[-1]
    w, b = init_conv_params(keys[len(conv_filters) - 1], in_channels, out_channels, kernel)
    params["convs"].append(dict(w=w, b=b, stride=stride, padding=None, relu=True))

    # _logits: 1x1 conv, no activation.  The module computes
    # same_padding_1d(ceil((in_size - kernel)/stride), 1, 1) which is always
    # (0, 0) for a 1x1/stride-1 conv.
    w, b = init_conv_params(keys[-1], out_channels, num_outputs, 1)
    params["logits"] = dict(w=w, b=b, stride=1, padding=(0, 0), relu=False)
    return params


# ----------------------------------------------------------------------------
# Pure-JAX reference (lax conv) for correctness check
# ----------------------------------------------------------------------------
def _conv_ref(x, w_kio, b, stride, padding, relu):
    pad = padding if padding is not None else (0, 0)
    y = jax.lax.conv_general_dilated(
        x, w_kio, window_strides=(stride,), padding=[pad],
        dimension_numbers=("NWC", "WIO", "NWC"))
    y = y + b.reshape(1, 1, -1)
    return jnp.maximum(y, 0.0) if relu else y


def _forward_ref(params, obs):
    x = obs.astype(jnp.float32)
    for layer in params["convs"]:
        x = _conv_ref(x, layer["w"], layer["b"], layer["stride"],
                      layer["padding"], layer["relu"])
    lg = params["logits"]
    x = _conv_ref(x, lg["w"], lg["b"], lg["stride"], lg["padding"], lg["relu"])
    return x[:, 0, :]


if __name__ == "__main__":
    # Small config: obs_space.shape == (W=16, C=4), num_outputs=6
    B, W, C = 2, 16, 4
    num_outputs = 6
    conv_filters = [[8, 4, 2], [16, 4, 2], [32, 4, 1]]  # last conv: width 4 -> 1 (valid)

    root = jax.random.PRNGKey(0)
    k_obs, k_params, k_big = jax.random.split(root, 3)
    obs = jax.random.normal(k_obs, (B, W, C), jnp.float32)

    params = build_vision_network_1d(k_params, W, C, conv_filters, num_outputs)
    metas, n_out = _network_metas(params, W, C)

    # --- f32 path (matches torch `.float()` semantics) ---------------------
    packed_f32 = pack_dense_params(params, metas, jnp.float32)
    fwd = jax.jit(partial(vision_network_1d_forward, metas=metas,
                          num_outputs=n_out, compute_dtype=jnp.float32))
    logits = jax.block_until_ready(fwd(packed_f32, obs))
    assert logits.shape == (B, num_outputs), logits.shape
    ref = jax.block_until_ready(_forward_ref(params, obs))
    np.testing.assert_allclose(np.asarray(logits), np.asarray(ref),
                               rtol=1e-5, atol=1e-5)

    # --- multi-step grid path (B not a multiple of tb; partial last block) --
    B2 = 100
    obs_big = jax.random.normal(k_big, (B2, W, C), jnp.float32)
    logits_big = jax.block_until_ready(fwd(packed_f32, obs_big))
    ref_big = jax.block_until_ready(_forward_ref(params, obs_big))
    np.testing.assert_allclose(np.asarray(logits_big), np.asarray(ref_big),
                               rtol=1e-5, atol=1e-5)

    # --- optional bf16 fast path (halves the dominant obs HBM read) --------
    packed_bf16 = pack_dense_params(params, metas, jnp.bfloat16)
    fwd_bf16 = jax.jit(partial(vision_network_1d_forward, metas=metas,
                               num_outputs=n_out, compute_dtype=jnp.bfloat16))
    logits_bf16 = jax.block_until_ready(fwd_bf16(packed_bf16, obs_big))
    np.testing.assert_allclose(np.asarray(logits_bf16, dtype=np.float32),
                               np.asarray(ref_big), rtol=5e-2, atol=5e-2)

    print("KERNEL_OK")
</pallas_src>

<mosaic_0001>
module attributes {stable_mosaic.version = 11 : i64} {
  func.func @kernel(%arg0: i32, %arg1: memref<2x64xf32, #tpu.memory_space<vmem>>, %arg2: memref<64x64xf32, #tpu.memory_space<vmem>>, %arg3: memref<1x64xf32, #tpu.memory_space<vmem>>, %arg4: memref<64x64xf32, #tpu.memory_space<vmem>>, %arg5: memref<1x64xf32, #tpu.memory_space<vmem>>, %arg6: memref<64x32xf32, #tpu.memory_space<vmem>>, %arg7: memref<1x32xf32, #tpu.memory_space<vmem>>, %arg8: memref<32x6xf32, #tpu.memory_space<vmem>>, %arg9: memref<1x6xf32, #tpu.memory_space<vmem>>, %arg10: memref<2x6xf32, #tpu.memory_space<vmem>>) attributes {dimension_semantics = [#tpu.dimension_semantics<parallel>], iteration_bounds = array<i64: 1>, scalar_prefetch = 0 : i64, scratch_operands = 0 : i64, tpu.core_type = #tpu.core_type<tc>, window_params = [{transform_indices = @transform_0, window_bounds = array<i64: 2, 64>}, {pipeline_mode = #tpu.pipeline_mode<synchronous>, transform_indices = @transform_1, window_bounds = array<i64: 64, 64>}, {pipeline_mode = #tpu.pipeline_mode<synchronous>, transform_indices = @transform_2, window_bounds = array<i64: 1, 64>}, {pipeline_mode = #tpu.pipeline_mode<synchronous>, transform_indices = @transform_3, window_bounds = array<i64: 64, 64>}, {pipeline_mode = #tpu.pipeline_mode<synchronous>, transform_indices = @transform_4, window_bounds = array<i64: 1, 64>}, {pipeline_mode = #tpu.pipeline_mode<synchronous>, transform_indices = @transform_5, window_bounds = array<i64: 64, 32>}, {pipeline_mode = #tpu.pipeline_mode<synchronous>, transform_indices = @transform_6, window_bounds = array<i64: 1, 32>}, {pipeline_mode = #tpu.pipeline_mode<synchronous>, transform_indices = @transform_7, window_bounds = array<i64: 32, 6>}, {pipeline_mode = #tpu.pipeline_mode<synchronous>, transform_indices = @transform_8, window_bounds = array<i64: 1, 6>}, {transform_indices = @transform_9, window_bounds = array<i64: 2, 6>}]} {
    %c0 = arith.constant 0 : index
    %c0_0 = arith.constant 0 : index
    %0 = vector.load %arg1[%c0, %c0_0] : memref<2x64xf32, #tpu.memory_space<vmem>>, vector<2x64xf32>
    %c0_1 = arith.constant 0 : index
    %c0_2 = arith.constant 0 : index
    %1 = vector.load %arg2[%c0_1, %c0_2] : memref<64x64xf32, #tpu.memory_space<vmem>>, vector<64x64xf32>
    %cst = arith.constant dense<0.000000e+00> : vector<2x64xf32>
    %2 = tpu.matmul %0, %1, %cst {dimension_numbers = #tpu.dot_dimension_numbers<[1], [0], [0], [1], [0, 0, 1, 1], [], []>} : vector<2x64xf32>, vector<64x64xf32>, vector<2x64xf32> -> vector<2x64xf32>
    %c0_3 = arith.constant 0 : index
    %c0_4 = arith.constant 0 : index
    %3 = vector.load %arg3[%c0_3, %c0_4] : memref<1x64xf32, #tpu.memory_space<vmem>>, vector<1x64xf32>
    %4 = vector.broadcast %3 : vector<1x64xf32> to vector<2x64xf32>
    %5 = arith.addf %2, %4 : vector<2x64xf32>
    %cst_5 = arith.constant 0.000000e+00 : f32
    %6 = vector.broadcast %cst_5 : f32 to vector<2x64xf32>
    %7 = arith.maximumf %5, %6 : vector<2x64xf32>
    %c0_6 = arith.constant 0 : index
    %c0_7 = arith.constant 0 : index
    %8 = vector.load %arg4[%c0_6, %c0_7] : memref<64x64xf32, #tpu.memory_space<vmem>>, vector<64x64xf32>
    %cst_8 = arith.constant dense<0.000000e+00> : vector<2x64xf32>
    %9 = tpu.matmul %7, %8, %cst_8 {dimension_numbers = #tpu.dot_dimension_numbers<[1], [0], [0], [1], [0, 0, 1, 1], [], []>} : vector<2x64xf32>, vector<64x64xf32>, vector<2x64xf32> -> vector<2x64xf32>
    %c0_9 = arith.constant 0 : index
    %c0_10 = arith.constant 0 : index
    %10 = vector.load %arg5[%c0_9, %c0_10] : memref<1x64xf32, #tpu.memory_space<vmem>>, vector<1x64xf32>
    %11 = vector.broadcast %10 : vector<1x64xf32> to vector<2x64xf32>
    %12 = arith.addf %9, %11 : vector<2x64xf32>
    %cst_11 = arith.constant 0.000000e+00 : f32
    %13 = vector.broadcast %cst_11 : f32 to vector<2x64xf32>
    %14 = arith.maximumf %12, %13 : vector<2x64xf32>
    %c0_12 = arith.constant 0 : index
    %c0_13 = arith.constant 0 : index
    %15 = vector.load %arg6[%c0_12, %c0_13] : memref<64x32xf32, #tpu.memory_space<vmem>>, vector<64x32xf32>
    %cst_14 = arith.constant dense<0.000000e+00> : vector<2x32xf32>
    %16 = tpu.matmul %14, %15, %cst_14 {dimension_numbers = #tpu.dot_dimension_numbers<[1], [0], [0], [1], [0, 0, 1, 1], [], []>} : vector<2x64xf32>, vector<64x32xf32>, vector<2x32xf32> -> vector<2x32xf32>
    %c0_15 = arith.constant 0 : index
    %c0_16 = arith.constant 0 : index
    %17 = vector.load %arg7[%c0_15, %c0_16] : memref<1x32xf32, #tpu.memory_space<vmem>>, vector<1x32xf32>
    %18 = vector.broadcast %17 : vector<1x32xf32> to vector<2x32xf32>
    %19 = arith.addf %16, %18 : vector<2x32xf32>
    %cst_17 = arith.constant 0.000000e+00 : f32
    %20 = vector.broadcast %cst_17 : f32 to vector<2x32xf32>
    %21 = arith.maximumf %19, %20 : vector<2x32xf32>
    %c0_18 = arith.constant 0 : index
    %c0_19 = arith.constant 0 : index
    %22 = vector.load %arg8[%c0_18, %c0_19] : memref<32x6xf32, #tpu.memory_space<vmem>>, vector<32x6xf32>
    %cst_20 = arith.constant dense<0.000000e+00> : vector<2x6xf32>
    %23 = tpu.matmul %21, %22, %cst_20 {dimension_numbers = #tpu.dot_dimension_numbers<[1], [0], [0], [1], [0, 0, 1, 1], [], []>} : vector<2x32xf32>, vector<32x6xf32>, vector<2x6xf32> -> vector<2x6xf32>
    %c0_21 = arith.constant 0 : index
    %c0_22 = arith.constant 0 : index
    %24 = vector.load %arg9[%c0_21, %c0_22] : memref<1x6xf32, #tpu.memory_space<vmem>>, vector<1x6xf32>
    %25 = vector.broadcast %24 : vector<1x6xf32> to vector<2x6xf32>
    %26 = arith.addf %23, %25 : vector<2x6xf32>
    %c0_23 = arith.constant 0 : index
    %c0_24 = arith.constant 0 : index
    %27 = vector.load %arg10[%c0_23, %c0_24] : memref<2x6xf32, #tpu.memory_space<vmem>>, vector<2x6xf32>
    tpu.vector_store %arg10[%c0_23, %c0_24], %26 {strides = array<i32>} : memref<2x6xf32, #tpu.memory_space<vmem>>, vector<2x6xf32>,
    return
  }
  func.func @transform_0(%arg0: i32) -> (i32, i32) {
    %c0_i32 = arith.constant 0 : i32
    %c0_i32_0 = arith.constant 0 : i32
    return %arg0, %c0_i32 : i32, i32
  }
  func.func @transform_1(%arg0: i32) -> (i32, i32) {
    %c0_i32 = arith.constant 0 : i32
    %c0_i32_0 = arith.constant 0 : i32
    %c0_i32_1 = arith.constant 0 : i32
    return %c0_i32, %c0_i32_0 : i32, i32
  }
  func.func @transform_2(%arg0: i32) -> (i32, i32) {
    %c0_i32 = arith.constant 0 : i32
    %c0_i32_0 = arith.constant 0 : i32
    %c0_i32_1 = arith.constant 0 : i32
    return %c0_i32, %c0_i32_0 : i32, i32
  }
  func.func @transform_3(%arg0: i32) -> (i32, i32) {
    %c0_i32 = arith.constant 0 : i32
    %c0_i32_0 = arith.constant 0 : i32
    %c0_i32_1 = arith.constant 0 : i32
    return %c0_i32, %c0_i32_0 : i32, i32
  }
  func.func @transform_4(%arg0: i32) -> (i32, i32) {
    %c0_i32 = arith.constant 0 : i32
    %c0_i32_0 = arith.constant 0 : i32
    %c0_i32_1 = arith.constant 0 : i32
    return %c0_i32, %c0_i32_0 : i32, i32
  }
  func.func @transform_5(%arg0: i32) -> (i32, i32) {
    %c0_i32 = arith.constant 0 : i32
    %c0_i32_0 = arith.constant 0 : i32
    %c0_i32_1 = arith.constant 0 : i32
    return %c0_i32, %c0_i32_0 : i32, i32
  }
  func.func @transform_6(%arg0: i32) -> (i32, i32) {
    %c0_i32 = arith.constant 0 : i32
    %c0_i32_0 = arith.constant 0 : i32
    %c0_i32_1 = arith.constant 0 : i32
    return %c0_i32, %c0_i32_0 : i32, i32
  }
  func.func @transform_7(%arg0: i32) -> (i32, i32) {
    %c0_i32 = arith.constant 0 : i32
    %c0_i32_0 = arith.constant 0 : i32
    %c0_i32_1 = arith.constant 0 : i32
    return %c0_i32, %c0_i32_0 : i32, i32
  }
  func.func @transform_8(%arg0: i32) -> (i32, i32) {
    %c0_i32 = arith.constant 0 : i32
    %c0_i32_0 = arith.constant 0 : i32
    %c0_i32_1 = arith.constant 0 : i32
    return %c0_i32, %c0_i32_0 : i32, i32
  }
  func.func @transform_9(%arg0: i32) -> (i32, i32) {
    %c0_i32 = arith.constant 0 : i32
    %c0_i32_0 = arith.constant 0 : i32
    return %arg0, %c0_i32 : i32, i32
  }
}

</mosaic_0001>

<llo_original>
// kernel: vision_network_1d_forward.1
$region0: #{vision_network_1d_forward.1}
  #allocation0 [shape = 'u32[]', space=smem, size = 0x4, offset = 0x4, fixed_abs, tag = 'smem constant byte address 0x4 - core index']
  #allocation1 [shape = 'u32[144,128]{1,0:T(1,128)}', space=vmem, size = 0x12000, scoped, tag = 'internal scratch']
  %s0 = inlined_call_operand.vmem [shape: f32[2,64], index: 0, kind: input, shape index: {}]
  %s1 = inlined_call_operand.vmem [shape: f32[64,64], index: 1, kind: input, shape index: {}]
  %s2 = inlined_call_operand.vmem [shape: f32[1,64], index: 2, kind: input, shape index: {}]
  %s3 = inlined_call_operand.vmem [shape: f32[64,64], index: 3, kind: input, shape index: {}]
  %s4 = inlined_call_operand.vmem [shape: f32[1,64], index: 4, kind: input, shape index: {}]
  %s5 = inlined_call_operand.vmem [shape: f32[64,32], index: 5, kind: input, shape index: {}]
  %s6 = inlined_call_operand.vmem [shape: f32[1,32], index: 6, kind: input, shape index: {}]
  %s7 = inlined_call_operand.vmem [shape: f32[32,6], index: 7, kind: input, shape index: {}]
  %s8 = inlined_call_operand.vmem [shape: f32[1,6], index: 8, kind: input, shape index: {}]
  %s9 = inlined_call_operand.hbm [shape: f32[2,6], index: 9, kind: output, shape index: {}]
  %s10 = sld [smem:[#allocation0]]
  $region46: #{vision_network_1d_forward.1} parent=0
    _
  %s12 = ssub.s32 1, %s10
  %s13 = scalar_select 0, %s12, %s10
  $region1: #{vision_network_1d_forward.1} parent=0
    #allocation2 [shape = 'u8[1024]{0}', space=vmem, size = 0x400, scoped, tag = 'output window, operand 0, single buffered']
    #allocation3 [shape = 's32[1]{0}', space=sflag, size = 0x4, scoped, tag = 'scoped memory for vision_network_1d_forward.1']
    %14 = vsyncpa [#allocation3], 0
    // Predicated region
    $region2: #{vision_network_1d_forward.1} parent=1 // pred_check
      _
    $region3: #{vision_network_1d_forward.1} parent=1 // pred_check_branch
      %16 = sbr.rel (0) target = $region5
    $region4: #{vision_network_1d_forward.1} parent=1 // pred_region
      _
    $region5: #{vision_network_1d_forward.1} parent=1 // pred_fallthru
      _
    // Predicated region
    $region6: #{vision_network_1d_forward.1} parent=1 // pred_check
      _
    $region7: #{vision_network_1d_forward.1} parent=1 // pred_check_branch
      %18 = sbr.rel (0) target = $region9
    $region8: #{vision_network_1d_forward.1} parent=1 // pred_region
      _
    $region9: #{vision_network_1d_forward.1} parent=1 // pred_fallthru
      _
    // Predicated region
    $region10: #{vision_network_1d_forward.1} parent=1 // pred_check
      _
    $region11: #{vision_network_1d_forward.1} parent=1 // pred_check_branch
      %20 = sbr.rel (0) target = $region13
    $region12: #{vision_network_1d_forward.1} parent=1 // pred_region
      _
    $region13: #{vision_network_1d_forward.1} parent=1 // pred_fallthru
      _
    // Predicated region
    $region14: #{vision_network_1d_forward.1} parent=1 // pred_check
      _
    $region15: #{vision_network_1d_forward.1} parent=1 // pred_check_branch
      %22 = sbr.rel (0) target = $region17
    $region16: #{vision_network_1d_forward.1} parent=1 // pred_region
      _
    $region17: #{vision_network_1d_forward.1} parent=1 // pred_fallthru
      _
    // Predicated region
    $region18: #{vision_network_1d_forward.1} parent=1 // pred_check
      _
    $region19: #{vision_network_1d_forward.1} parent=1 // pred_check_branch
      %24 = sbr.rel (0) target = $region21
    $region20: #{vision_network_1d_forward.1} parent=1 // pred_region
      _
    $region21: #{vision_network_1d_forward.1} parent=1 // pred_fallthru
      _
    // Predicated region
    $region22: #{vision_network_1d_forward.1} parent=1 // pred_check
      _
    $region23: #{vision_network_1d_forward.1} parent=1 // pred_check_branch
      %26 = sbr.rel (0) target = $region25
    $region24: #{vision_network_1d_forward.1} parent=1 // pred_region
      _
    $region25: #{vision_network_1d_forward.1} parent=1 // pred_fallthru
      _
    // Predicated region
    $region26: #{vision_network_1d_forward.1} parent=1 // pred_check
      _
    $region27: #{vision_network_1d_forward.1} parent=1 // pred_check_branch
      %28 = sbr.rel (0) target = $region29
    $region28: #{vision_network_1d_forward.1} parent=1 // pred_region
      _
    $region29: #{vision_network_1d_forward.1} parent=1 // pred_fallthru
      _
    // Predicated region
    $region30: #{vision_network_1d_forward.1} parent=1 // pred_check
      _
    $region31: #{vision_network_1d_forward.1} parent=1 // pred_check_branch
      %30 = sbr.rel (0) target = $region33
    $region32: #{vision_network_1d_forward.1} parent=1 // pred_region
      _
    $region33: #{vision_network_1d_forward.1} parent=1 // pred_fallthru
      _
    // Predicated region
    $region34: #{vision_network_1d_forward.1} parent=1 // pred_check
      _
    $region35: #{vision_network_1d_forward.1} parent=1 // pred_check_branch
      %32 = sbr.rel (0) target = $region37
    $region36: #{vision_network_1d_forward.1} parent=1 // pred_region
      _
    $region37: #{vision_network_1d_forward.1} parent=1 // pred_fallthru
      _
    %v33 = vld [vmem:[%s0] sm:$0x3]
    %v34 = vld [vmem:[%s1] sm:$0xff]
    %v35 = vld [vmem:[%s1 + $0x8] sm:$0xff]
    %v36 = vld [vmem:[%s1 + $0x10] sm:$0xff]
    %v37 = vld [vmem:[%s1 + $0x18] sm:$0xff]
    %v38 = vld [vmem:[%s1 + $0x20] sm:$0xff]
    %v39 = vld [vmem:[%s1 + $0x28] sm:$0xff]
    %v40 = vld [vmem:[%s1 + $0x30] sm:$0xff]
    %v41 = vld [vmem:[%s1 + $0x38] sm:$0xff]
    %v42 = vld [vmem:[%s2] sm:$0x1]
    %v44 = vlaneseq
    %v45 = vshrl.u32 %v44, 7
    %v46 = vsub.s32 0, %v45
    %v47 = vrot.slane %v42, %v46
    %vm49 = vcmask 523264
    %v51 = vsel %vm49, %v33, 0
    %53 = vmatprep.subr.mxu0 0.0
    %54 = vmatpush1.msra.mxu0 %v34
    %55 = vmatprep.subr.mxu0 0.0
    %56 = vmatpush1.msra.mxu0 %v35
    %57 = vmatprep.subr.mxu0 0.0
    %58 = vmatpush1.msra.mxu0 %v36
    %59 = vmatprep.subr.mxu0 0.0
    %60 = vmatpush1.msra.mxu0 %v37
    %61 = vmatprep.subr.mxu0 0.0
    %62 = vmatpush1.msra.mxu0 %v38
    %63 = vmatprep.subr.mxu0 0.0
    %64 = vmatpush1.msra.mxu0 %v39
    %65 = vmatprep.subr.mxu0 0.0
    %66 = vmatpush1.msra.mxu0 %v40
    %67 = vmatprep.subr.mxu0 0.0
    %68 = vmatpush1.msra.mxu0 %v41
    %69 = vmatprep.subr.mxu0 0.0
    %70 = vmatpush1.msra.mxu0 0.0
    %71 = vmatprep.subr.mxu0 0.0
    %72 = vmatpush1.msra.mxu0 0.0
    %73 = vmatprep.subr.mxu0 0.0
    %74 = vmatpush1.msra.mxu0 0.0
    %75 = vmatprep.subr.mxu0 0.0
    %76 = vmatpush1.msra.mxu0 0.0
    %77 = vmatprep.subr.mxu0 0.0
    %78 = vmatpush1.msra.mxu0 0.0
    %79 = vmatprep.subr.mxu0 0.0
    %80 = vmatpush1.msra.mxu0 0.0
    %81 = vmatprep.subr.mxu0 0.0
    %82 = vmatpush1.msra.mxu0 0.0
    %83 = vmatprep.subr.mxu0 0.0
    %84 = vmatpush1.msra.mxu0 0.0
    %85 = vmatprep.subr.mxu0 0.0
    %86 = vmatpush1.msra.mxu0 0.0
    %87 = vmatprep.subr.mxu0 0.0
    %88 = vmatpush1.msra.mxu0 0.0
    %89 = vmatprep.subr.mxu0 0.0
    %90 = vmatpush1.msra.mxu0 0.0
    %91 = vmatprep.subr.mxu0 0.0
    %92 = vmatpush1.msra.mxu0 0.0
    %93 = vmatprep.subr.mxu0 0.0
    %94 = vmatpush1.msra.mxu0 0.0
    %95 = vmatprep.subr.mxu0 0.0
    %96 = vmatpush1.msra.mxu0 0.0
    %97 = vmatprep.subr.mxu0 0.0
    %98 = vmatpush1.msra.mxu0 0.0
    %99 = vmatprep.subr.mxu0 0.0
    %100 = vmatpush1.msra.mxu0 0.0
    %101 = vmatprep.subr.mxu0 0.0
    %102 = vmatpush1.msra.mxu0 0.0
    %103 = vmatprep.subr.mxu0 0.0
    %104 = vmatpush1.msra.mxu0 0.0
    %105 = vmatprep.subr.mxu0 0.0
    %106 = vmatpush1.msra.mxu0 0.0
    %107 = vmatprep.subr.mxu0 0.0
    %108 = vmatpush1.msra.mxu0 0.0
    %109 = vmatprep.subr.mxu0 0.0
    %110 = vmatpush1.msra.mxu0 0.0
    %111 = vmatprep.subr.mxu0 0.0
    %112 = vmatpush1.msra.mxu0 0.0
    %113 = vmatprep.subr.mxu0 0.0
    %114 = vmatpush1.msra.mxu0 0.0
    %115 = vmatprep.subr.mxu0 0.0
    %116 = vmatpush1.msra.mxu0 0.0
    %117 = vmatprep.mubr.f32.mxu0 0.0
    %118 = vmatmul.mubr.f32.gmra.mrb[0].mxu0 %v51
    %v119 = vpop.f32.mrb[0].mxu0
    %v120 = vadd.f32 %v47, %v119
    %v121 = vpop.f32.mrb[0].mxu0
    %122 = vdwg.mxu0
    %v123 = vmax.f32 %v120, 0.0
    %v124 = vld [vmem:[%s3] sm:$0xff]
    %v125 = vld [vmem:[%s3 + $0x8] sm:$0xff]
    %v126 = vld [vmem:[%s3 + $0x10] sm:$0xff]
    %v127 = vld [vmem:[%s3 + $0x18] sm:$0xff]
    %v128 = vld [vmem:[%s3 + $0x20] sm:$0xff]
    %v129 = vld [vmem:[%s3 + $0x28] sm:$0xff]
    %v130 = vld [vmem:[%s3 + $0x30] sm:$0xff]
    %v131 = vld [vmem:[%s3 + $0x38] sm:$0xff]
    %v132 = vld [vmem:[%s4] sm:$0x1]
    %v134 = vlaneseq
    %v135 = vshrl.u32 %v134, 7
    %v136 = vsub.s32 0, %v135
    %v137 = vrot.slane %v132, %v136
    %v140 = vsel %vm49, %v123, 0
    %142 = vmatprep.subr.mxu0 0.0
    %143 = vmatpush1.msra.mxu0 %v124
    %144 = vmatprep.subr.mxu0 0.0
    %145 = vmatpush1.msra.mxu0 %v125
    %146 = vmatprep.subr.mxu0 0.0
    %147 = vmatpush1.msra.mxu0 %v126
    %148 = vmatprep.subr.mxu0 0.0
    %149 = vmatpush1.msra.mxu0 %v127
    %150 = vmatprep.subr.mxu0 0.0
    %151 = vmatpush1.msra.mxu0 %v128
    %152 = vmatprep.subr.mxu0 0.0
    %153 = vmatpush1.msra.mxu0 %v129
    %154 = vmatprep.subr.mxu0 0.0
    %155 = vmatpush1.msra.mxu0 %v130
    %156 = vmatprep.subr.mxu0 0.0
    %157 = vmatpush1.msra.mxu0 %v131
    %158 = vmatprep.subr.mxu0 0.0
    %159 = vmatpush1.msra.mxu0 0.0
    %160 = vmatprep.subr.mxu0 0.0
    %161 = vmatpush1.msra.mxu0 0.0
    %162 = vmatprep.subr.mxu0 0.0
    %163 = vmatpush1.msra.mxu0 0.0
    %164 = vmatprep.subr.mxu0 0.0
    %165 = vmatpush1.msra.mxu0 0.0
    %166 = vmatprep.subr.mxu0 0.0
    %167 = vmatpush1.msra.mxu0 0.0
    %168 = vmatprep.subr.mxu0 0.0
    %169 = vmatpush1.msra.mxu0 0.0
    %170 = vmatprep.subr.mxu0 0.0
    %171 = vmatpush1.msra.mxu0 0.0
    %172 = vmatprep.subr.mxu0 0.0
    %173 = vmatpush1.msra.mxu0 0.0
    %174 = vmatprep.subr.mxu0 0.0
    %175 = vmatpush1.msra.mxu0 0.0
    %176 = vmatprep.subr.mxu0 0.0
    %177 = vmatpush1.msra.mxu0 0.0
    %178 = vmatprep.subr.mxu0 0.0
    %179 = vmatpush1.msra.mxu0 0.0
    %180 = vmatprep.subr.mxu0 0.0
    %181 = vmatpush1.msra.mxu0 0.0
    %182 = vmatprep.subr.mxu0 0.0
    %183 = vmatpush1.msra.mxu0 0.0
    %184 = vmatprep.subr.mxu0 0.0
    %185 = vmatpush1.msra.mxu0 0.0
    %186 = vmatprep.subr.mxu0 0.0
    %187 = vmatpush1.msra.mxu0 0.0
    %188 = vmatprep.subr.mxu0 0.0
    %189 = vmatpush1.msra.mxu0 0.0
    %190 = vmatprep.subr.mxu0 0.0
    %191 = vmatpush1.msra.mxu0 0.0
    %192 = vmatprep.subr.mxu0 0.0
    %193 = vmatpush1.msra.mxu0 0.0
    %194 = vmatprep.subr.mxu0 0.0
    %195 = vmatpush1.msra.mxu0 0.0
    %196 = vmatprep.subr.mxu0 0.0
    %197 = vmatpush1.msra.mxu0 0.0
    %198 = vmatprep.subr.mxu0 0.0
    %199 = vmatpush1.msra.mxu0 0.0
    %200 = vmatprep.subr.mxu0 0.0
    %201 = vmatpush1.msra.mxu0 0.0
    %202 = vmatprep.subr.mxu0 0.0
    %203 = vmatpush1.msra.mxu0 0.0
    %204 = vmatprep.subr.mxu0 0.0
    %205 = vmatpush1.msra.mxu0 0.0
    %206 = vmatprep.mubr.f32.mxu0 0.0
    %207 = vmatmul.mubr.f32.gmra.mrb[0].mxu0 %v140
    %v208 = vpop.f32.mrb[0].mxu0
    %v209 = vadd.f32 %v137, %v208
    %v210 = vpop.f32.mrb[0].mxu0
    %211 = vdwg.mxu0
    %v212 = vmax.f32 %v209, 0.0
    %v213 = vld [vmem:[%s5] sm:$0xff]
    %v214 = vld [vmem:[%s5 + $0x8] sm:$0xff]
    %v215 = vld [vmem:[%s5 + $0x10] sm:$0xff]
    %v216 = vld [vmem:[%s5 + $0x18] sm:$0xff]
    %v217 = vld [vmem:[%s5 + $0x20] sm:$0xff]
    %v218 = vld [vmem:[%s5 + $0x28] sm:$0xff]
    %v219 = vld [vmem:[%s5 + $0x30] sm:$0xff]
    %v220 = vld [vmem:[%s5 + $0x38] sm:$0xff]
    %v221 = vld [vmem:[%s6] sm:$0x1]
    %v223 = vlaneseq
    %v224 = vshrl.u32 %v223, 7
    %v225 = vsub.s32 0, %v224
    %v226 = vrot.slane %v221, %v225
    %v229 = vsel %vm49, %v212, 0
    %231 = vmatprep.subr.mxu0 0.0
    %232 = vmatpush1.msra.mxu0 %v213
    %233 = vmatprep.subr.mxu0 0.0
    %234 = vmatpush1.msra.mxu0 %v214
    %235 = vmatprep.subr.mxu0 0.0
    %236 = vmatpush1.msra.mxu0 %v215
    %237 = vmatprep.subr.mxu0 0.0
    %238 = vmatpush1.msra.mxu0 %v216
    %239 = vmatprep.subr.mxu0 0.0
    %240 = vmatpush1.msra.mxu0 %v217
    %241 = vmatprep.subr.mxu0 0.0
    %242 = vmatpush1.msra.mxu0 %v218
    %243 = vmatprep.subr.mxu0 0.0
    %244 = vmatpush1.msra.mxu0 %v219
    %245 = vmatprep.subr.mxu0 0.0
    %246 = vmatpush1.msra.mxu0 %v220
    %247 = vmatprep.subr.mxu0 0.0
    %248 = vmatpush1.msra.mxu0 0.0
    %249 = vmatprep.subr.mxu0 0.0
    %250 = vmatpush1.msra.mxu0 0.0
    %251 = vmatprep.subr.mxu0 0.0
    %252 = vmatpush1.msra.mxu0 0.0
    %253 = vmatprep.subr.mxu0 0.0
    %254 = vmatpush1.msra.mxu0 0.0
    %255 = vmatprep.subr.mxu0 0.0
    %256 = vmatpush1.msra.mxu0 0.0
    %257 = vmatprep.subr.mxu0 0.0
    %258 = vmatpush1.msra.mxu0 0.0
    %259 = vmatprep.subr.mxu0 0.0
    %260 = vmatpush1.msra.mxu0 0.0
    %261 = vmatprep.subr.mxu0 0.0
    %262 = vmatpush1.msra.mxu0 0.0
    %263 = vmatprep.subr.mxu0 0.0
    %264 = vmatpush1.msra.mxu0 0.0
    %265 = vmatprep.subr.mxu0 0.0
    %266 = vmatpush1.msra.mxu0 0.0
    %267 = vmatprep.subr.mxu0 0.0
    %268 = vmatpush1.msra.mxu0 0.0
    %269 = vmatprep.subr.mxu0 0.0
    %270 = vmatpush1.msra.mxu0 0.0
    %271 = vmatprep.subr.mxu0 0.0
    %272 = vmatpush1.msra.mxu0 0.0
    %273 = vmatprep.subr.mxu0 0.0
    %274 = vmatpush1.msra.mxu0 0.0
    %275 = vmatprep.subr.mxu0 0.0
    %276 = vmatpush1.msra.mxu0 0.0
    %277 = vmatprep.subr.mxu0 0.0
    %278 = vmatpush1.msra.mxu0 0.0
    %279 = vmatprep.subr.mxu0 0.0
    %280 = vmatpush1.msra.mxu0 0.0
    %281 = vmatprep.subr.mxu0 0.0
    %282 = vmatpush1.msra.mxu0 0.0
    %283 = vmatprep.subr.mxu0 0.0
    %284 = vmatpush1.msra.mxu0 0.0
    %285 = vmatprep.subr.mxu0 0.0
    %286 = vmatpush1.msra.mxu0 0.0
    %287 = vmatprep.subr.mxu0 0.0
    %288 = vmatpush1.msra.mxu0 0.0
    %289 = vmatprep.subr.mxu0 0.0
    %290 = vmatpush1.msra.mxu0 0.0
    %291 = vmatprep.subr.mxu0 0.0
    %292 = vmatpush1.msra.mxu0 0.0
    %293 = vmatprep.subr.mxu0 0.0
    %294 = vmatpush1.msra.mxu0 0.0
    %295 = vmatprep.mubr.f32.mxu0 0.0
    %296 = vmatmul.mubr.f32.gmra.mrb[0].mxu0 %v229
    %v297 = vpop.f32.mrb[0].mxu0
    %v298 = vadd.f32 %v226, %v297
    %v299 = vpop.f32.mrb[0].mxu0
    %300 = vdwg.mxu0
    %v301 = vmax.f32 %v298, 0.0
    %v302 = vld [vmem:[%s7] sm:$0xff]
    %v303 = vld [vmem:[%s7 + $0x8] sm:$0xff]
    %v304 = vld [vmem:[%s7 + $0x10] sm:$0xff]
    %v305 = vld [vmem:[%s7 + $0x18] sm:$0xff]
    %v306 = vld [vmem:[%s8] sm:$0x1]
    %v308 = vlaneseq
    %v309 = vshrl.u32 %v308, 7
    %v310 = vsub.s32 0, %v309
    %v311 = vrot.slane %v306, %v310
    %vm313 = vcmask 261120
    %v315 = vsel %vm313, %v301, 0
    %317 = vmatprep.subr.mxu0 0.0
    %318 = vmatpush1.msra.mxu0 %v302
    %319 = vmatprep.subr.mxu0 0.0
    %320 = vmatpush1.msra.mxu0 %v303
    %321 = vmatprep.subr.mxu0 0.0
    %322 = vmatpush1.msra.mxu0 %v304
    %323 = vmatprep.subr.mxu0 0.0
    %324 = vmatpush1.msra.mxu0 %v305
    %325 = vmatprep.subr.mxu0 0.0
    %326 = vmatpush1.msra.mxu0 0.0
    %327 = vmatprep.subr.mxu0 0.0
    %328 = vmatpush1.msra.mxu0 0.0
    %329 = vmatprep.subr.mxu0 0.0
    %330 = vmatpush1.msra.mxu0 0.0
    %331 = vmatprep.subr.mxu0 0.0
    %332 = vmatpush1.msra.mxu0 0.0
    %333 = vmatprep.subr.mxu0 0.0
    %334 = vmatpush1.msra.mxu0 0.0
    %335 = vmatprep.subr.mxu0 0.0
    %336 = vmatpush1.msra.mxu0 0.0
    %337 = vmatprep.subr.mxu0 0.0
    %338 = vmatpush1.msra.mxu0 0.0
    %339 = vmatprep.subr.mxu0 0.0
    %340 = vmatpush1.msra.mxu0 0.0
    %341 = vmatprep.subr.mxu0 0.0
    %342 = vmatpush1.msra.mxu0 0.0
    %343 = vmatprep.subr.mxu0 0.0
    %344 = vmatpush1.msra.mxu0 0.0
    %345 = vmatprep.subr.mxu0 0.0
    %346 = vmatpush1.msra.mxu0 0.0
    %347 = vmatprep.subr.mxu0 0.0
    %348 = vmatpush1.msra.mxu0 0.0
    %349 = vmatprep.subr.mxu0 0.0
    %350 = vmatpush1.msra.mxu0 0.0
    %351 = vmatprep.subr.mxu0 0.0
    %352 = vmatpush1.msra.mxu0 0.0
    %353 = vmatprep.subr.mxu0 0.0
    %354 = vmatpush1.msra.mxu0 0.0
    %355 = vmatprep.subr.mxu0 0.0
    %356 = vmatpush1.msra.mxu0 0.0
    %357 = vmatprep.subr.mxu0 0.0
    %358 = vmatpush1.msra.mxu0 0.0
    %359 = vmatprep.subr.mxu0 0.0
    %360 = vmatpush1.msra.mxu0 0.0
    %361 = vmatprep.subr.mxu0 0.0
    %362 = vmatpush1.msra.mxu0 0.0
    %363 = vmatprep.subr.mxu0 0.0
    %364 = vmatpush1.msra.mxu0 0.0
    %365 = vmatprep.subr.mxu0 0.0
    %366 = vmatpush1.msra.mxu0 0.0
    %367 = vmatprep.subr.mxu0 0.0
    %368 = vmatpush1.msra.mxu0 0.0
    %369 = vmatprep.subr.mxu0 0.0
    %370 = vmatpush1.msra.mxu0 0.0
    %371 = vmatprep.subr.mxu0 0.0
    %372 = vmatpush1.msra.mxu0 0.0
    %373 = vmatprep.subr.mxu0 0.0
    %374 = vmatpush1.msra.mxu0 0.0
    %375 = vmatprep.subr.mxu0 0.0
    %376 = vmatpush1.msra.mxu0 0.0
    %377 = vmatprep.subr.mxu0 0.0
    %378 = vmatpush1.msra.mxu0 0.0
    %379 = vmatprep.subr.mxu0 0.0
    %380 = vmatpush1.msra.mxu0 0.0
    %381 = vmatprep.mubr.f32.mxu0 0.0
    %382 = vmatmul.mubr.f32.gmra.mrb[0].mxu0 %v315
    %v383 = vpop.f32.mrb[0].mxu0
    %v384 = vadd.f32 %v311, %v383
    %v385 = vpop.f32.mrb[0].mxu0
    %386 = vdwg.mxu0
    %vm387 = vcmask 41984
    %388 = vst.msk [vmem:[#allocation2] sm:$0x3] %vm387, %v384
    // Predicated region
    $region38: #{vision_network_1d_forward.1} parent=1 // pred_check
      _
    $region39: #{vision_network_1d_forward.1} parent=1 // pred_check_branch
      %390 = sbr.rel (0) target = $region41
    $region40: #{vision_network_1d_forward.1} parent=1 // pred_region
      %s392 = ssub.s32 32, 32
      %393 = vsyncadd [#allocation3], %s392
      %s395 = sshll.u32 [#allocation2], 4
      %s396 = int_to_ptr.vmem [resolvable:$true] %s395
      %398 = dma.vmem_to_hbm [thread:$0]  %s396, 32, %s9, [#allocation3]
    $region41: #{vision_network_1d_forward.1} parent=1 // pred_fallthru
      _
    // Predicated region
    $region42: #{vision_network_1d_forward.1} parent=1 // pred_check
      _
    $region43: #{vision_network_1d_forward.1} parent=1 // pred_check_branch
      %400 = sbr.rel (0) target = $region45
    $region44: #{vision_network_1d_forward.1} parent=1 // pred_region
      %401 = dma.done [#allocation3], 32
    $region45: #{vision_network_1d_forward.1} parent=1 // pred_fallthru
      _
    %402 = vsyncpa [#allocation3], 1

</llo_original>
